<compile_context>
chip_gen: v7x
topology: tpu7x:2x2x1
jax: 0.10.0
libtpu: 0.0.40
codegen_flags: <defaults>
</compile_context>

<pallas_src>
import math

import jax
import jax.numpy as jnp
from jax.experimental import pallas as pl
from jax.experimental.pallas import tpu as pltpu


def _round_up(n: int, m: int) -> int:
    return ((n + m - 1) // m) * m


def _ff_kernel(x_ref, w1_ref, b1_ref, w2_ref, o_ref):
    # hidden = sigmoid(x @ W1 + b1): bf16 (or f32) operands, f32 accumulation,
    # bias add + sigmoid kept in f32.
    h = jnp.dot(x_ref[...], w1_ref[...], preferred_element_type=jnp.float32)
    h = jax.nn.sigmoid(h + b1_ref[...])                  # (tB, H) + (1, H)
    # logits = hidden @ W2   (fc2 has no bias when nb_classes > 1)
    o = jnp.dot(h.astype(w2_ref.dtype), w2_ref[...],
                preferred_element_type=jnp.float32)
    o_ref[...] = o.astype(o_ref.dtype)


def feed_forward(x, w1, b1, w2, *, batch_tile=256,
                 compute_dtype=jnp.bfloat16,
                 vmem_limit_bytes=32 * 1024 * 1024):
    """x: (B, D_in); w1: (D_in, H); b1: (1, H); w2: (H, C) -> (B, C) f32 logits."""
    B, D_in = x.shape
    H = w1.shape[1]
    C = w2.shape[1]

    # Lane-dense output: pad the class dim up to a multiple of 128.
    Cp = _round_up(C, 128)
    # Batch tile: multiple of 8, no larger than the (rounded-up) batch.
    tile = min(batch_tile, _round_up(B, 8))
    Bp = _round_up(B, tile)
    grid = (Bp // tile,)

    # Cast matmul operands; keep bias in f32 for the VPU/EUP math.
    xb = x.astype(compute_dtype)
    if Bp != B:
        xb = jnp.pad(xb, ((0, Bp - B), (0, 0)))
    w1b = w1.astype(compute_dtype)
    w2b = jnp.pad(w2.astype(compute_dtype), ((0, 0), (0, Cp - C)))
    b1f = b1.astype(jnp.float32).reshape(1, H)

    cost = pl.CostEstimate(
        flops=2 * Bp * D_in * H + 2 * Bp * H * Cp,
        transcendentals=Bp * H,                       # sigmoid
        bytes_accessed=(xb.size * xb.dtype.itemsize
                        + w1b.size * w1b.dtype.itemsize
                        + b1f.size * b1f.dtype.itemsize
                        + w2b.size * w2b.dtype.itemsize
                        + Bp * Cp * 4),
    )

    out = pl.pallas_call(
        _ff_kernel,
        out_shape=jax.ShapeDtypeStruct((Bp, Cp), jnp.float32),
        grid=grid,
        in_specs=[
            pl.BlockSpec((tile, D_in), lambda i: (i, 0)),   # x tile (pipelined)
            pl.BlockSpec((D_in, H), lambda i: (0, 0)),      # W1 (resident)
            pl.BlockSpec((1, H), lambda i: (0, 0)),         # b1 (resident)
            pl.BlockSpec((H, Cp), lambda i: (0, 0)),        # W2 padded (resident)
        ],
        out_specs=pl.BlockSpec((tile, Cp), lambda i: (i, 0)),
        compiler_params=pltpu.CompilerParams(
            dimension_semantics=("parallel",),
            vmem_limit_bytes=vmem_limit_bytes),
        cost_estimate=cost,
    )(xb, w1b, b1f, w2b)

    return out[:B, :C]


def _xavier_uniform(key, fan_in, fan_out):
    # matches torch.nn.init.xavier_uniform_ bound for a (out, in) weight
    bound = math.sqrt(6.0 / (fan_in + fan_out))
    # sample in torch's (out, in) orientation, then transpose to (in, out)
    w = jax.random.uniform(key, (fan_out, fan_in), jnp.float32, -bound, bound)
    return w.T


if __name__ == "__main__":
    # Small shapes consistent with the module's forward.
    batch = 500              # deliberately NOT a multiple of the 256-row tile
    input_size = 32          # size of one dataset item
    hidden = 64              # settings.hidden_layers_size[0]
    nb_classes = 4           # > 1  => fc2 has no bias

    key = jax.random.PRNGKey(0)
    kx, k1, k2 = jax.random.split(key, 3)

    x = jax.random.normal(kx, (batch, input_size), jnp.float32)
    w1 = _xavier_uniform(k1, input_size, hidden)              # (D_in, H)
    b1 = jnp.full((1, hidden), 0.01, jnp.float32)             # bias filled with 0.01
    w2 = _xavier_uniform(k2, hidden, nb_classes)              # (H, C), no bias

    # Pure-JAX f32 reference (matches the PyTorch module semantics).
    ref = jax.nn.sigmoid(x @ w1 + b1) @ w2

    # 1) f32 compute path: exact semantics check.
    out_f32 = jax.block_until_ready(
        feed_forward(x, w1, b1, w2, compute_dtype=jnp.float32))
    assert out_f32.shape == (batch, nb_classes)
    assert jnp.allclose(out_f32, ref, atol=1e-5, rtol=1e-5)

    # 2) default bf16 compute path (v6e/v7x fast path): loose tolerance for bf16.
    out = jax.block_until_ready(feed_forward(x, w1, b1, w2))
    assert out.shape == (batch, nb_classes)
    assert jnp.allclose(out, ref, atol=5e-2, rtol=5e-2)

    # TODO(synk): training_step / Adam / BCEWithLogitsLoss are training utilities,
    # not part of forward(), and are intentionally not implemented as kernels.
    print("KERNEL_OK")
</pallas_src>

<mosaic_0001>
module attributes {stable_mosaic.version = 11 : i64} {
  func.func @_ff_kernel(%arg0: i32, %arg1: memref<256x32xf32, #tpu.memory_space<vmem>>, %arg2: memref<32x64xf32, #tpu.memory_space<vmem>>, %arg3: memref<1x64xf32, #tpu.memory_space<vmem>>, %arg4: memref<64x128xf32, #tpu.memory_space<vmem>>, %arg5: memref<256x128xf32, #tpu.memory_space<vmem>>) attributes {dimension_semantics = [#tpu.dimension_semantics<parallel>], iteration_bounds = array<i64: 2>, scalar_prefetch = 0 : i64, scratch_operands = 0 : i64, tpu.core_type = #tpu.core_type<tc>, window_params = [{transform_indices = @transform_0, window_bounds = array<i64: 256, 32>}, {pipeline_mode = #tpu.pipeline_mode<synchronous>, transform_indices = @transform_1, window_bounds = array<i64: 32, 64>}, {pipeline_mode = #tpu.pipeline_mode<synchronous>, transform_indices = @transform_2, window_bounds = array<i64: 1, 64>}, {pipeline_mode = #tpu.pipeline_mode<synchronous>, transform_indices = @transform_3, window_bounds = array<i64: 64, 128>}, {transform_indices = @transform_4, window_bounds = array<i64: 256, 128>}]} {
    %c0 = arith.constant 0 : index
    %c0_0 = arith.constant 0 : index
    %0 = vector.load %arg1[%c0, %c0_0] : memref<256x32xf32, #tpu.memory_space<vmem>>, vector<256x32xf32>
    %c0_1 = arith.constant 0 : index
    %c0_2 = arith.constant 0 : index
    %1 = vector.load %arg2[%c0_1, %c0_2] : memref<32x64xf32, #tpu.memory_space<vmem>>, vector<32x64xf32>
    %cst = arith.constant dense<0.000000e+00> : vector<256x64xf32>
    %2 = tpu.matmul %0, %1, %cst {dimension_numbers = #tpu.dot_dimension_numbers<[1], [0], [0], [1], [0, 0, 1, 1], [], []>} : vector<256x32xf32>, vector<32x64xf32>, vector<256x64xf32> -> vector<256x64xf32>
    %c0_3 = arith.constant 0 : index
    %c0_4 = arith.constant 0 : index
    %3 = vector.load %arg3[%c0_3, %c0_4] : memref<1x64xf32, #tpu.memory_space<vmem>>, vector<1x64xf32>
    %4 = vector.broadcast %3 : vector<1x64xf32> to vector<256x64xf32>
    %5 = arith.addf %2, %4 : vector<256x64xf32>
    %6 = arith.negf %5 : vector<256x64xf32>
    %7 = math.exp %6 : vector<256x64xf32>
    %cst_5 = arith.constant 1.000000e+00 : f32
    %8 = vector.broadcast %cst_5 : f32 to vector<256x64xf32>
    %9 = arith.addf %8, %7 : vector<256x64xf32>
    %10 = arith.divf %8, %9 : vector<256x64xf32>
    %c0_6 = arith.constant 0 : index
    %c0_7 = arith.constant 0 : index
    %11 = vector.load %arg4[%c0_6, %c0_7] : memref<64x128xf32, #tpu.memory_space<vmem>>, vector<64x128xf32>
    %cst_8 = arith.constant dense<0.000000e+00> : vector<256x128xf32>
    %12 = tpu.matmul %10, %11, %cst_8 {dimension_numbers = #tpu.dot_dimension_numbers<[1], [0], [0], [1], [0, 0, 1, 1], [], []>} : vector<256x64xf32>, vector<64x128xf32>, vector<256x128xf32> -> vector<256x128xf32>
    %c0_9 = arith.constant 0 : index
    %c0_10 = arith.constant 0 : index
    %13 = vector.load %arg5[%c0_9, %c0_10] : memref<256x128xf32, #tpu.memory_space<vmem>>, vector<256x128xf32>
    tpu.vector_store %arg5[%c0_9, %c0_10], %12 {strides = array<i32>} : memref<256x128xf32, #tpu.memory_space<vmem>>, vector<256x128xf32>,
    return
  }
  func.func @transform_0(%arg0: i32) -> (i32, i32) {
    %c0_i32 = arith.constant 0 : i32
    %c0_i32_0 = arith.constant 0 : i32
    return %arg0, %c0_i32 : i32, i32
  }
  func.func @transform_1(%arg0: i32) -> (i32, i32) {
    %c0_i32 = arith.constant 0 : i32
    %c0_i32_0 = arith.constant 0 : i32
    %c0_i32_1 = arith.constant 0 : i32
    return %c0_i32, %c0_i32_0 : i32, i32
  }
  func.func @transform_2(%arg0: i32) -> (i32, i32) {
    %c0_i32 = arith.constant 0 : i32
    %c0_i32_0 = arith.constant 0 : i32
    %c0_i32_1 = arith.constant 0 : i32
    return %c0_i32, %c0_i32_0 : i32, i32
  }
  func.func @transform_3(%arg0: i32) -> (i32, i32) {
    %c0_i32 = arith.constant 0 : i32
    %c0_i32_0 = arith.constant 0 : i32
    %c0_i32_1 = arith.constant 0 : i32
    return %c0_i32, %c0_i32_0 : i32, i32
  }
  func.func @transform_4(%arg0: i32) -> (i32, i32) {
    %c0_i32 = arith.constant 0 : i32
    %c0_i32_0 = arith.constant 0 : i32
    return %arg0, %c0_i32 : i32, i32
  }
}

</mosaic_0001>

<llo_original>
// kernel: tpu_custom_call.1
$region0: #{tpu_custom_call.1}
  #allocation0 [shape = 'u32[]', space=smem, size = 0x4, offset = 0x4, fixed_abs, tag = 'smem constant byte address 0x4 - core index']
  #allocation1 [shape = 'u32[144,128]{1,0:T(1,128)}', space=vmem, size = 0x12000, scoped, tag = 'internal scratch']
  %s0 = inlined_call_operand.vmem [shape: f32[512,32], index: 0, kind: input, shape index: {}]
  %s1 = inlined_call_operand.vmem [shape: f32[32,64], index: 1, kind: input, shape index: {}]
  %s2 = inlined_call_operand.vmem [shape: f32[1,64], index: 2, kind: input, shape index: {}]
  %s3 = inlined_call_operand.vmem [shape: f32[64,128], index: 3, kind: input, shape index: {}]
  %s4 = inlined_call_operand.hbm [shape: f32[512,128], index: 4, kind: output, shape index: {}]
  %s5 = sld [smem:[#allocation0]]
  $region49: #{tpu_custom_call.1} parent=0
    _
  %s7 = ssub.s32 1, %s5
  %s8 = scalar_select 0, %s7, %s5
  $region1: #{tpu_custom_call.1} parent=0
    #allocation2 [shape = 'u8[262144]{0}', space=vmem, size = 0x40000, scoped, tag = 'output window, operand 0']
    #allocation3 [shape = 's32[2]{0}', space=sflag, size = 0x8, scoped, tag = 'scoped memory for tpu_custom_call.1']
    %9 = vsyncpa [#allocation3], 0
    %s10 = scalar_lea.sflag [#allocation3], 1
    %11 = vsyncpa %s10, 0
    loop: start=0, step=1, limit=4
    $region2: #{tpu_custom_call.1} parent=1 // loop_pre_header
      _
    $region3: #{tpu_custom_call.1} parent=1 // loop_header
      %s13 = sphi 0, %s17
      %p14 = scmp.ge.s32.totalorder %s13, 4
      %s23 = sphi 0, %s25
      %s26 = sphi 0, %s23
      %s27 = sphi 0, %s26
      %s43 = sphi 0, %s27
      %s47 = sphi 0, %s47
      %s49 = sphi 0, %s47
      %s50 = sphi 0, %s49
      %s64 = sphi 0, %s50
      %s68 = sphi 0, %s68
      %s70 = sphi 0, %s68
      %s71 = sphi 0, %s70
      %s85 = sphi 0, %s71
      %s89 = sphi 0, %s89
      %s91 = sphi 0, %s89
      %s92 = sphi 0, %s91
      %s106 = sphi 0, %s92
      %s112 = sphi 0, %s114
      %s115 = sphi 0, %s112
      %s116 = sphi 0, %s115
      %s132 = sphi 0, %s116
    $region4: #{tpu_custom_call.1} parent=1 // loop_header_branch
      %16 = sbr.rel (%p14) target = $region8
    $region5: #{tpu_custom_call.1} parent=1 // loop_body
      %s18 = ssub.s32 %s13, 1
      %s19 = ssub.s32 %s13, 2
      %s20 = sadd.s32 %s13, 1
      %s21 = ssub.s32 %s13, %s20
      %p22 = scmp.eq.s32.totalorder %s21, 0
      %s24 = sadd.s32 %s23, 1
      %s25 = scalar_select %p22, %s23, %s24
      %p28 = pneg %p22
      %p29 = scmp.eq.s32.totalorder %s13, 1
      %p30 = por %p28, %p29
      %p31 = scmp.ne.s32.totalorder %s23, %s26
      %p32 = scmp.eq.s32.totalorder %s13, 0
      %p33 = por %p31, %p32
      %p34 = scmp.ne.s32.totalorder %s23, %s26
      %p35 = scmp.eq.s32.totalorder %s18, 1
      %p36 = por %p34, %p35
      %p37 = scmp.ne.s32.totalorder %s26, %s27
      %p38 = scmp.eq.s32.totalorder %s18, 0
      %p39 = por %p37, %p38
      %p40 = scmp.ne.s32.totalorder %s26, %s27
      %p41 = scmp.eq.s32.totalorder %s19, 1
      %p42 = por %p40, %p41
      %p44 = scmp.ne.s32.totalorder %s27, %s43
      %p45 = scmp.eq.s32.totalorder %s19, 0
      %p46 = por %p44, %p45
      %s48 = sadd.s32 %s47, 1
      %p51 = scmp.eq.s32.totalorder %s13, 1
      %p52 = scmp.ne.s32.totalorder %s47, %s49
      %p53 = scmp.eq.s32.totalorder %s13, 0
      %p54 = por %p52, %p53
      %p55 = scmp.ne.s32.totalorder %s47, %s49
      %p56 = scmp.eq.s32.totalorder %s18, 1
      %p57 = por %p55, %p56
      %p58 = scmp.ne.s32.totalorder %s49, %s50
      %p59 = scmp.eq.s32.totalorder %s18, 0
      %p60 = por %p58, %p59
      %p61 = scmp.ne.s32.totalorder %s49, %s50
      %p62 = scmp.eq.s32.totalorder %s19, 1
      %p63 = por %p61, %p62
      %p65 = scmp.ne.s32.totalorder %s50, %s64
      %p66 = scmp.eq.s32.totalorder %s19, 0
      %p67 = por %p65, %p66
      %s69 = sadd.s32 %s68, 1
      %p72 = scmp.eq.s32.totalorder %s13, 1
      %p73 = scmp.ne.s32.totalorder %s68, %s70
      %p74 = scmp.eq.s32.totalorder %s13, 0
      %p75 = por %p73, %p74
      %p76 = scmp.ne.s32.totalorder %s68, %s70
      %p77 = scmp.eq.s32.totalorder %s18, 1
      %p78 = por %p76, %p77
      %p79 = scmp.ne.s32.totalorder %s70, %s71
      %p80 = scmp.eq.s32.totalorder %s18, 0
      %p81 = por %p79, %p80
      %p82 = scmp.ne.s32.totalorder %s70, %s71
      %p83 = scmp.eq.s32.totalorder %s19, 1
      %p84 = por %p82, %p83
      %p86 = scmp.ne.s32.totalorder %s71, %s85
      %p87 = scmp.eq.s32.totalorder %s19, 0
      %p88 = por %p86, %p87
      %s90 = sadd.s32 %s89, 1
      %p93 = scmp.eq.s32.totalorder %s13, 1
      %p94 = scmp.ne.s32.totalorder %s89, %s91
      %p95 = scmp.eq.s32.totalorder %s13, 0
      %p96 = por %p94, %p95
      %p97 = scmp.ne.s32.totalorder %s89, %s91
      %p98 = scmp.eq.s32.totalorder %s18, 1
      %p99 = por %p97, %p98
      %p100 = scmp.ne.s32.totalorder %s91, %s92
      %p101 = scmp.eq.s32.totalorder %s18, 0
      %p102 = por %p100, %p101
      %p103 = scmp.ne.s32.totalorder %s91, %s92
      %p104 = scmp.eq.s32.totalorder %s19, 1
      %p105 = por %p103, %p104
      %p107 = scmp.ne.s32.totalorder %s92, %s106
      %p108 = scmp.eq.s32.totalorder %s19, 0
      %p109 = por %p107, %p108
      %s110 = ssub.s32 %s13, %s20
      %p111 = scmp.eq.s32.totalorder %s110, 0
      %s113 = sadd.s32 %s112, 1
      %s114 = scalar_select %p111, %s112, %s113
      %p117 = pneg %p111
      %p118 = scmp.eq.s32.totalorder %s13, 1
      %p119 = por %p117, %p118
      %p120 = scmp.ne.s32.totalorder %s112, %s115
      %p121 = scmp.eq.s32.totalorder %s13, 0
      %p122 = por %p120, %p121
      %p123 = scmp.ne.s32.totalorder %s112, %s115
      %p124 = scmp.eq.s32.totalorder %s18, 1
      %p125 = por %p123, %p124
      %p126 = scmp.ne.s32.totalorder %s115, %s116
      %p127 = scmp.eq.s32.totalorder %s18, 0
      %p128 = por %p126, %p127
      %p129 = scmp.ne.s32.totalorder %s115, %s116
      %p130 = scmp.eq.s32.totalorder %s19, 1
      %p131 = por %p129, %p130
      %p133 = scmp.ne.s32.totalorder %s116, %s132
      %p134 = scmp.eq.s32.totalorder %s19, 0
      %p135 = por %p133, %p134
      %p136 = scmp.le.s32.totalorder 1, %s13
      %p137 = scmp.lt.s32.totalorder %s13, 3
      %p138 = pnand %p136, %p137
      %p139 = pneg %p138
      // Predicated region
      $region9: #{tpu_custom_call.1} parent=5 // pred_check
        _
      $region10: #{tpu_custom_call.1} parent=5 // pred_check_branch
        %141 = sbr.rel (%p138) target = $region12
      $region11: #{tpu_custom_call.1} parent=5 // pred_region
        %s142 = ssub.s32 %s13, 1
        // Predicated region
        $region13: #{tpu_custom_call.1} parent=11 // pred_check
          %p143 = pneg %p60
        $region14: #{tpu_custom_call.1} parent=11 // pred_check_branch
          %145 = sbr.rel (%p143) target = $region16
        $region15: #{tpu_custom_call.1} parent=11 // pred_region
          _
        $region16: #{tpu_custom_call.1} parent=11 // pred_fallthru
          _
        // Predicated region
        $region17: #{tpu_custom_call.1} parent=11 // pred_check
          %p146 = pneg %p81
        $region18: #{tpu_custom_call.1} parent=11 // pred_check_branch
          %148 = sbr.rel (%p146) target = $region20
        $region19: #{tpu_custom_call.1} parent=11 // pred_region
          _
        $region20: #{tpu_custom_call.1} parent=11 // pred_fallthru
          _
        // Predicated region
        $region21: #{tpu_custom_call.1} parent=11 // pred_check
          %p149 = pneg %p102
        $region22: #{tpu_custom_call.1} parent=11 // pred_check_branch
          %151 = sbr.rel (%p149) target = $region24
        $region23: #{tpu_custom_call.1} parent=11 // pred_region
          _
        $region24: #{tpu_custom_call.1} parent=11 // pred_fallthru
          _
      $region12: #{tpu_custom_call.1} parent=5 // pred_fallthru
        _
      %p152 = scmp.lt.s32.totalorder %s13, 2
      // Predicated region
      $region25: #{tpu_custom_call.1} parent=5 // pred_check
        %p153 = pneg %p152
      $region26: #{tpu_custom_call.1} parent=5 // pred_check_branch
        %155 = sbr.rel (%p153) target = $region28
      $region27: #{tpu_custom_call.1} parent=5 // pred_region
        // Predicated region
        $region29: #{tpu_custom_call.1} parent=27 // pred_check
          %p156 = pneg %p33
        $region30: #{tpu_custom_call.1} parent=27 // pred_check_branch
          %158 = sbr.rel (%p156) target = $region32
        $region31: #{tpu_custom_call.1} parent=27 // pred_region
          %s159 = smul.u32 32, %s13
          %p160 = scmp.lt.s32.totalorder %s159, 63
          %s161 = scalar_select %p160, %s159, 63
          %s162 = smul.addr %s161, 8
          %s163 = scalar_lea.vmem %s0, %s162
          %s164 = smul.u32 32, %s13
        $region32: #{tpu_custom_call.1} parent=27 // pred_fallthru
          _
      $region28: #{tpu_custom_call.1} parent=5 // pred_fallthru
        _
      %p165 = scmp.le.s32.totalorder 1, %s13
      %p166 = scmp.lt.s32.totalorder %s13, 3
      %p167 = pnand %p165, %p166
      %p168 = pneg %p167
      // Predicated region
      $region33: #{tpu_custom_call.1} parent=5 // pred_check
        _
      $region34: #{tpu_custom_call.1} parent=5 // pred_check_branch
        %170 = sbr.rel (%p167) target = $region36
      $region35: #{tpu_custom_call.1} parent=5 // pred_region
        %s171 = ssub.s32 %s13, 1
        %s172 = smul.u32 32, %s18
        %p173 = scmp.lt.s32.totalorder %s172, 63
        %s174 = scalar_select %p173, %s172, 63
        %s175 = smul.addr %s174, 8
        %s176 = scalar_lea.vmem %s0, %s175
        %p177 = pneg %p39
        %p178 = pneg %p36
        %p179 = pneg %p60
        %p180 = pneg %p57
        %p181 = pneg %p81
        %p182 = pneg %p78
        %p183 = pneg %p102
        %p184 = pneg %p99
        %p185 = pneg %p128
        %p186 = pneg %p125
        %s187 = sand.u32 %s115, 1
        %s188 = scalar_lea.sflag [#allocation3], %s187
        %s189 = sand.u32 %s115, 1
        %s190 = smul.addr %s189, 256
        %s191 = scalar_lea.vmem [#allocation2], %s190
        %s192 = smul.u32 32, %s18
        %p193 = scmp.lt.s32.totalorder %s192, 63
        %s194 = scalar_select %p193, %s192, 63
        %s195 = smul.addr %s194, 8
        %s196 = scalar_lea.vmem %s0, %s195
        %s197 = smul.u32 32, %s18
        %s198 = smul.u32 32, %s18
        %v199 = vld [vmem:[%s196] sm:$0xff]
        %v200 = vld [vmem:[%s196 + $0x8] sm:$0xff]
        %v201 = vld [vmem:[%s196 + $0x10] sm:$0xff]
        %v202 = vld [vmem:[%s196 + $0x18] sm:$0xff]
        %v203 = vld [vmem:[%s196 + $0x20] sm:$0xff]
        %v204 = vld [vmem:[%s196 + $0x28] sm:$0xff]
        %v205 = vld [vmem:[%s196 + $0x30] sm:$0xff]
        %v206 = vld [vmem:[%s196 + $0x38] sm:$0xff]
        %v207 = vld [vmem:[%s196 + $0x40] sm:$0xff]
        %v208 = vld [vmem:[%s196 + $0x48] sm:$0xff]
        %v209 = vld [vmem:[%s196 + $0x50] sm:$0xff]
        %v210 = vld [vmem:[%s196 + $0x58] sm:$0xff]
        %v211 = vld [vmem:[%s196 + $0x60] sm:$0xff]
        %v212 = vld [vmem:[%s196 + $0x68] sm:$0xff]
        %v213 = vld [vmem:[%s196 + $0x70] sm:$0xff]
        %v214 = vld [vmem:[%s196 + $0x78] sm:$0xff]
        %v215 = vld [vmem:[%s196 + $0x80] sm:$0xff]
        %v216 = vld [vmem:[%s196 + $0x88] sm:$0xff]
        %v217 = vld [vmem:[%s196 + $0x90] sm:$0xff]
        %v218 = vld [vmem:[%s196 + $0x98] sm:$0xff]
        %v219 = vld [vmem:[%s196 + $0xa0] sm:$0xff]
        %v220 = vld [vmem:[%s196 + $0xa8] sm:$0xff]
        %v221 = vld [vmem:[%s196 + $0xb0] sm:$0xff]
        %v222 = vld [vmem:[%s196 + $0xb8] sm:$0xff]
        %v223 = vld [vmem:[%s196 + $0xc0] sm:$0xff]
        %v224 = vld [vmem:[%s196 + $0xc8] sm:$0xff]
        %v225 = vld [vmem:[%s196 + $0xd0] sm:$0xff]
        %v226 = vld [vmem:[%s196 + $0xd8] sm:$0xff]
        %v227 = vld [vmem:[%s196 + $0xe0] sm:$0xff]
        %v228 = vld [vmem:[%s196 + $0xe8] sm:$0xff]
        %v229 = vld [vmem:[%s196 + $0xf0] sm:$0xff]
        %v230 = vld [vmem:[%s196 + $0xf8] sm:$0xff]
        %v231 = vld [vmem:[%s1] sm:$0xff]
        %v232 = vld [vmem:[%s1 + $0x8] sm:$0xff]
        %v233 = vld [vmem:[%s1 + $0x10] sm:$0xff]
        %v234 = vld [vmem:[%s1 + $0x18] sm:$0xff]
        %v235 = vld [vmem:[%s2] sm:$0x1]
        %v237 = vlaneseq
        %v238 = vshrl.u32 %v237, 7
        %v239 = vsub.s32 0, %v238
        %v240 = vrot.slane %v235, %v239
        %vm242 = vcmask 261120
        %v244 = vsel %vm242, %v199, 0
        %v247 = vsel %vm242, %v200, 0
        %v250 = vsel %vm242, %v201, 0
        %v253 = vsel %vm242, %v202, 0
        %v256 = vsel %vm242, %v203, 0
        %v259 = vsel %vm242, %v204, 0
        %v262 = vsel %vm242, %v205, 0
        %v265 = vsel %vm242, %v206, 0
        %v268 = vsel %vm242, %v207, 0
        %v271 = vsel %vm242, %v208, 0
        %v274 = vsel %vm242, %v209, 0
        %v277 = vsel %vm242, %v210, 0
        %v280 = vsel %vm242, %v211, 0
        %v283 = vsel %vm242, %v212, 0
        %v286 = vsel %vm242, %v213, 0
        %v289 = vsel %vm242, %v214, 0
        %v292 = vsel %vm242, %v215, 0
        %v295 = vsel %vm242, %v216, 0
        %v298 = vsel %vm242, %v217, 0
        %v301 = vsel %vm242, %v218, 0
        %v304 = vsel %vm242, %v219, 0
        %v307 = vsel %vm242, %v220, 0
        %v310 = vsel %vm242, %v221, 0
        %v313 = vsel %vm242, %v222, 0
        %v316 = vsel %vm242, %v223, 0
        %v319 = vsel %vm242, %v224, 0
        %v322 = vsel %vm242, %v225, 0
        %v325 = vsel %vm242, %v226, 0
        %v328 = vsel %vm242, %v227, 0
        %v331 = vsel %vm242, %v228, 0
        %v334 = vsel %vm242, %v229, 0
        %v337 = vsel %vm242, %v230, 0
        %339 = vmatprep.subr.mxu0 0.0
        %340 = vmatpush1.msra.mxu0 %v231
        %341 = vmatprep.subr.mxu0 0.0
        %342 = vmatpush1.msra.mxu0 %v232
        %343 = vmatprep.subr.mxu0 0.0
        %344 = vmatpush1.msra.mxu0 %v233
        %345 = vmatprep.subr.mxu0 0.0
        %346 = vmatpush1.msra.mxu0 %v234
        %347 = vmatprep.subr.mxu0 0.0
        %348 = vmatpush1.msra.mxu0 0.0
        %349 = vmatprep.subr.mxu0 0.0
        %350 = vmatpush1.msra.mxu0 0.0
        %351 = vmatprep.subr.mxu0 0.0
        %352 = vmatpush1.msra.mxu0 0.0
        %353 = vmatprep.subr.mxu0 0.0
        %354 = vmatpush1.msra.mxu0 0.0
        %355 = vmatprep.subr.mxu0 0.0
        %356 = vmatpush1.msra.mxu0 0.0
        %357 = vmatprep.subr.mxu0 0.0
        %358 = vmatpush1.msra.mxu0 0.0
        %359 = vmatprep.subr.mxu0 0.0
        %360 = vmatpush1.msra.mxu0 0.0
        %361 = vmatprep.subr.mxu0 0.0
        %362 = vmatpush1.msra.mxu0 0.0
        %363 = vmatprep.subr.mxu0 0.0
        %364 = vmatpush1.msra.mxu0 0.0
        %365 = vmatprep.subr.mxu0 0.0
        %366 = vmatpush1.msra.mxu0 0.0
        %367 = vmatprep.subr.mxu0 0.0
        %368 = vmatpush1.msra.mxu0 0.0
        %369 = vmatprep.subr.mxu0 0.0
        %370 = vmatpush1.msra.mxu0 0.0
        %371 = vmatprep.subr.mxu0 0.0
        %372 = vmatpush1.msra.mxu0 0.0
        %373 = vmatprep.subr.mxu0 0.0
        %374 = vmatpush1.msra.mxu0 0.0
        %375 = vmatprep.subr.mxu0 0.0
        %376 = vmatpush1.msra.mxu0 0.0
        %377 = vmatprep.subr.mxu0 0.0
        %378 = vmatpush1.msra.mxu0 0.0
        %379 = vmatprep.subr.mxu0 0.0
        %380 = vmatpush1.msra.mxu0 0.0
        %381 = vmatprep.subr.mxu0 0.0
        %382 = vmatpush1.msra.mxu0 0.0
        %383 = vmatprep.subr.mxu0 0.0
        %384 = vmatpush1.msra.mxu0 0.0
        %385 = vmatprep.subr.mxu0 0.0
        %386 = vmatpush1.msra.mxu0 0.0
        %387 = vmatprep.subr.mxu0 0.0
        %388 = vmatpush1.msra.mxu0 0.0
        %389 = vmatprep.subr.mxu0 0.0
        %390 = vmatpush1.msra.mxu0 0.0
        %391 = vmatprep.subr.mxu0 0.0
        %392 = vmatpush1.msra.mxu0 0.0
        %393 = vmatprep.subr.mxu0 0.0
        %394 = vmatpush1.msra.mxu0 0.0
        %395 = vmatprep.subr.mxu0 0.0
        %396 = vmatpush1.msra.mxu0 0.0
        %397 = vmatprep.subr.mxu0 0.0
        %398 = vmatpush1.msra.mxu0 0.0
        %399 = vmatprep.subr.mxu0 0.0
        %400 = vmatpush1.msra.mxu0 0.0
        %401 = vmatprep.subr.mxu0 0.0
        %402 = vmatpush1.msra.mxu0 0.0
        %403 = vmatprep.mubr.f32.mxu0 0.0
        %404 = vmatmul.mubr.f32.gmra.mrb[0].mxu0 %v244
        %v405 = vpop.f32.mrb[0].mxu0
        %v406 = vadd.f32 %v240, %v405
        %v407 = vpop.f32.mrb[0].mxu0
        %408 = vmatprep.mubr.f32.mxu0 0.0
        %409 = vmatmul.mubr.f32.gmra.mrb[0].mxu0 %v247
        %v410 = vpop.f32.mrb[0].mxu0
        %v411 = vadd.f32 %v240, %v410
        %v412 = vpop.f32.mrb[0].mxu0
        %413 = vmatprep.mubr.f32.mxu0 0.0
        %414 = vmatmul.mubr.f32.gmra.mrb[0].mxu0 %v250
        %v415 = vpop.f32.mrb[0].mxu0
        %v416 = vadd.f32 %v240, %v415
        %v417 = vpop.f32.mrb[0].mxu0
        %418 = vmatprep.mubr.f32.mxu0 0.0
        %419 = vmatmul.mubr.f32.gmra.mrb[0].mxu0 %v253
        %v420 = vpop.f32.mrb[0].mxu0
        %v421 = vadd.f32 %v240, %v420
        %v422 = vpop.f32.mrb[0].mxu0
        %423 = vmatprep.mubr.f32.mxu0 0.0
        %424 = vmatmul.mubr.f32.gmra.mrb[0].mxu0 %v256
        %v425 = vpop.f32.mrb[0].mxu0
        %v426 = vadd.f32 %v240, %v425
        %v427 = vpop.f32.mrb[0].mxu0
        %428 = vmatprep.mubr.f32.mxu0 0.0
        %429 = vmatmul.mubr.f32.gmra.mrb[0].mxu0 %v259
        %v430 = vpop.f32.mrb[0].mxu0
        %v431 = vadd.f32 %v240, %v430
        %v432 = vpop.f32.mrb[0].mxu0
        %433 = vmatprep.mubr.f32.mxu0 0.0
        %434 = vmatmul.mubr.f32.gmra.mrb[0].mxu0 %v262
        %v435 = vpop.f32.mrb[0].mxu0
        %v436 = vadd.f32 %v240, %v435
        %v437 = vpop.f32.mrb[0].mxu0
        %438 = vmatprep.mubr.f32.mxu0 0.0
        %439 = vmatmul.mubr.f32.gmra.mrb[0].mxu0 %v265
        %v440 = vpop.f32.mrb[0].mxu0
        %v441 = vadd.f32 %v240, %v440
        %v442 = vpop.f32.mrb[0].mxu0
        %443 = vmatprep.mubr.f32.mxu0 0.0
        %444 = vmatmul.mubr.f32.gmra.mrb[0].mxu0 %v268
        %v445 = vpop.f32.mrb[0].mxu0
        %v446 = vadd.f32 %v240, %v445
        %v447 = vpop.f32.mrb[0].mxu0
        %448 = vmatprep.mubr.f32.mxu0 0.0
        %449 = vmatmul.mubr.f32.gmra.mrb[0].mxu0 %v271
        %v450 = vpop.f32.mrb[0].mxu0
        %v451 = vadd.f32 %v240, %v450
        %v452 = vpop.f32.mrb[0].mxu0
        %453 = vmatprep.mubr.f32.mxu0 0.0
        %454 = vmatmul.mubr.f32.gmra.mrb[0].mxu0 %v274
        %v455 = vpop.f32.mrb[0].mxu0
        %v456 = vadd.f32 %v240, %v455
        %v457 = vpop.f32.mrb[0].mxu0
        %458 = vmatprep.mubr.f32.mxu0 0.0
        %459 = vmatmul.mubr.f32.gmra.mrb[0].mxu0 %v277
        %v460 = vpop.f32.mrb[0].mxu0
        %v461 = vadd.f32 %v240, %v460
        %v462 = vpop.f32.mrb[0].mxu0
        %463 = vmatprep.mubr.f32.mxu0 0.0
        %464 = vmatmul.mubr.f32.gmra.mrb[0].mxu0 %v280
        %v465 = vpop.f32.mrb[0].mxu0
        %v466 = vadd.f32 %v240, %v465
        %v467 = vpop.f32.mrb[0].mxu0
        %468 = vmatprep.mubr.f32.mxu0 0.0
        %469 = vmatmul.mubr.f32.gmra.mrb[0].mxu0 %v283
        %v470 = vpop.f32.mrb[0].mxu0
        %v471 = vadd.f32 %v240, %v470
        %v472 = vpop.f32.mrb[0].mxu0
        %473 = vmatprep.mubr.f32.mxu0 0.0
        %474 = vmatmul.mubr.f32.gmra.mrb[0].mxu0 %v286
        %v475 = vpop.f32.mrb[0].mxu0
        %v476 = vadd.f32 %v240, %v475
        %v477 = vpop.f32.mrb[0].mxu0
        %478 = vmatprep.mubr.f32.mxu0 0.0
        %479 = vmatmul.mubr.f32.gmra.mrb[0].mxu0 %v289
        %v480 = vpop.f32.mrb[0].mxu0
        %v481 = vadd.f32 %v240, %v480
        %v482 = vpop.f32.mrb[0].mxu0
        %483 = vmatprep.mubr.f32.mxu0 0.0
        %484 = vmatmul.mubr.f32.gmra.mrb[0].mxu0 %v292
        %v485 = vpop.f32.mrb[0].mxu0
        %v486 = vadd.f32 %v240, %v485
        %v487 = vpop.f32.mrb[0].mxu0
        %488 = vmatprep.mubr.f32.mxu0 0.0
        %489 = vmatmul.mubr.f32.gmra.mrb[0].mxu0 %v295
        %v490 = vpop.f32.mrb[0].mxu0
        %v491 = vadd.f32 %v240, %v490
        %v492 = vpop.f32.mrb[0].mxu0
        %493 = vmatprep.mubr.f32.mxu0 0.0
        %494 = vmatmul.mubr.f32.gmra.mrb[0].mxu0 %v298
        %v495 = vpop.f32.mrb[0].mxu0
        %v496 = vadd.f32 %v240, %v495
        %v497 = vpop.f32.mrb[0].mxu0
        %498 = vmatprep.mubr.f32.mxu0 0.0
        %499 = vmatmul.mubr.f32.gmra.mrb[0].mxu0 %v301
        %v500 = vpop.f32.mrb[0].mxu0
        %v501 = vadd.f32 %v240, %v500
        %v502 = vpop.f32.mrb[0].mxu0
        %503 = vmatprep.mubr.f32.mxu0 0.0
        %504 = vmatmul.mubr.f32.gmra.mrb[0].mxu0 %v304
        %v505 = vpop.f32.mrb[0].mxu0
        %v506 = vadd.f32 %v240, %v505
        %v507 = vpop.f32.mrb[0].mxu0
        %508 = vmatprep.mubr.f32.mxu0 0.0
        %509 = vmatmul.mubr.f32.gmra.mrb[0].mxu0 %v307
        %v510 = vpop.f32.mrb[0].mxu0
        %v511 = vadd.f32 %v240, %v510
        %v512 = vpop.f32.mrb[0].mxu0
        %513 = vmatprep.mubr.f32.mxu0 0.0
        %514 = vmatmul.mubr.f32.gmra.mrb[0].mxu0 %v310
        %v515 = vpop.f32.mrb[0].mxu0
        %v516 = vadd.f32 %v240, %v515
        %v517 = vpop.f32.mrb[0].mxu0
        %518 = vmatprep.mubr.f32.mxu0 0.0
        %519 = vmatmul.mubr.f32.gmra.mrb[0].mxu0 %v313
        %v520 = vpop.f32.mrb[0].mxu0
        %v521 = vadd.f32 %v240, %v520
        %v522 = vpop.f32.mrb[0].mxu0
        %523 = vmatprep.mubr.f32.mxu0 0.0
        %524 = vmatmul.mubr.f32.gmra.mrb[0].mxu0 %v316
        %v525 = vpop.f32.mrb[0].mxu0
        %v526 = vadd.f32 %v240, %v525
        %v527 = vpop.f32.mrb[0].mxu0
        %528 = vmatprep.mubr.f32.mxu0 0.0
        %529 = vmatmul.mubr.f32.gmra.mrb[0].mxu0 %v319
        %v530 = vpop.f32.mrb[0].mxu0
        %v531 = vadd.f32 %v240, %v530
        %v532 = vpop.f32.mrb[0].mxu0
        %533 = vmatprep.mubr.f32.mxu0 0.0
        %534 = vmatmul.mubr.f32.gmra.mrb[0].mxu0 %v322
        %v535 = vpop.f32.mrb[0].mxu0
        %v536 = vadd.f32 %v240, %v535
        %v537 = vpop.f32.mrb[0].mxu0
        %538 = vmatprep.mubr.f32.mxu0 0.0
        %539 = vmatmul.mubr.f32.gmra.mrb[0].mxu0 %v325
        %v540 = vpop.f32.mrb[0].mxu0
        %v541 = vadd.f32 %v240, %v540
        %v542 = vpop.f32.mrb[0].mxu0
        %543 = vmatprep.mubr.f32.mxu0 0.0
        %544 = vmatmul.mubr.f32.gmra.mrb[0].mxu0 %v328
        %v545 = vpop.f32.mrb[0].mxu0
        %v546 = vadd.f32 %v240, %v545
        %v547 = vpop.f32.mrb[0].mxu0
        %548 = vmatprep.mubr.f32.mxu0 0.0
        %549 = vmatmul.mubr.f32.gmra.mrb[0].mxu0 %v331
        %v550 = vpop.f32.mrb[0].mxu0
        %v551 = vadd.f32 %v240, %v550
        %v552 = vpop.f32.mrb[0].mxu0
        %553 = vmatprep.mubr.f32.mxu0 0.0
        %554 = vmatmul.mubr.f32.gmra.mrb[0].mxu0 %v334
        %v555 = vpop.f32.mrb[0].mxu0
        %v556 = vadd.f32 %v240, %v555
        %v557 = vpop.f32.mrb[0].mxu0
        %558 = vmatprep.mubr.f32.mxu0 0.0
        %559 = vmatmul.mubr.f32.gmra.mrb[0].mxu0 %v337
        %v560 = vpop.f32.mrb[0].mxu0
        %v561 = vadd.f32 %v240, %v560
        %v562 = vpop.f32.mrb[0].mxu0
        %563 = vdwg.mxu0
        %v564 = vxor.u32 %v406, 2147483648
        %v565 = vxor.u32 %v411, 2147483648
        %v566 = vxor.u32 %v416, 2147483648
        %v567 = vxor.u32 %v421, 2147483648
        %v568 = vxor.u32 %v426, 2147483648
        %v569 = vxor.u32 %v431, 2147483648
        %v570 = vxor.u32 %v436, 2147483648
        %v571 = vxor.u32 %v441, 2147483648
        %v572 = vxor.u32 %v446, 2147483648
        %v573 = vxor.u32 %v451, 2147483648
        %v574 = vxor.u32 %v456, 2147483648
        %v575 = vxor.u32 %v461, 2147483648
        %v576 = vxor.u32 %v466, 2147483648
        %v577 = vxor.u32 %v471, 2147483648
        %v578 = vxor.u32 %v476, 2147483648
        %v579 = vxor.u32 %v481, 2147483648
        %v580 = vxor.u32 %v486, 2147483648
        %v581 = vxor.u32 %v491, 2147483648
        %v582 = vxor.u32 %v496, 2147483648
        %v583 = vxor.u32 %v501, 2147483648
        %v584 = vxor.u32 %v506, 2147483648
        %v585 = vxor.u32 %v511, 2147483648
        %v586 = vxor.u32 %v516, 2147483648
        %v587 = vxor.u32 %v521, 2147483648
        %v588 = vxor.u32 %v526, 2147483648
        %v589 = vxor.u32 %v531, 2147483648
        %v590 = vxor.u32 %v536, 2147483648
        %v591 = vxor.u32 %v541, 2147483648
        %v592 = vxor.u32 %v546, 2147483648
        %v593 = vxor.u32 %v551, 2147483648
        %v594 = vxor.u32 %v556, 2147483648
        %v595 = vxor.u32 %v561, 2147483648
        %v596 = vmul.f32 %v564, 1.442695
        %v597 = vpow.pop %v596
        %v598 = vmul.f32 %v565, 1.442695
        %v599 = vpow.pop %v598
        %v600 = vmul.f32 %v566, 1.442695
        %v601 = vpow.pop %v600
        %v602 = vmul.f32 %v567, 1.442695
        %v603 = vpow.pop %v602
        %v604 = vmul.f32 %v568, 1.442695
        %v605 = vpow.pop %v604
        %v606 = vmul.f32 %v569, 1.442695
        %v607 = vpow.pop %v606
        %v608 = vmul.f32 %v570, 1.442695
        %v609 = vpow.pop %v608
        %v610 = vmul.f32 %v571, 1.442695
        %v611 = vpow.pop %v610
        %v612 = vmul.f32 %v572, 1.442695
        %v613 = vpow.pop %v612
        %v614 = vmul.f32 %v573, 1.442695
        %v615 = vpow.pop %v614
        %v616 = vmul.f32 %v574, 1.442695
        %v617 = vpow.pop %v616
        %v618 = vmul.f32 %v575, 1.442695
        %v619 = vpow.pop %v618
        %v620 = vmul.f32 %v576, 1.442695
        %v621 = vpow.pop %v620
        %v622 = vmul.f32 %v577, 1.442695
        %v623 = vpow.pop %v622
        %v624 = vmul.f32 %v578, 1.442695
        %v625 = vpow.pop %v624
        %v626 = vmul.f32 %v579, 1.442695
        %v627 = vpow.pop %v626
        %v628 = vmul.f32 %v580, 1.442695
        %v629 = vpow.pop %v628
        %v630 = vmul.f32 %v581, 1.442695
        %v631 = vpow.pop %v630
        %v632 = vmul.f32 %v582, 1.442695
        %v633 = vpow.pop %v632
        %v634 = vmul.f32 %v583, 1.442695
        %v635 = vpow.pop %v634
        %v636 = vmul.f32 %v584, 1.442695
        %v637 = vpow.pop %v636
        %v638 = vmul.f32 %v585, 1.442695
        %v639 = vpow.pop %v638
        %v640 = vmul.f32 %v586, 1.442695
        %v641 = vpow.pop %v640
        %v642 = vmul.f32 %v587, 1.442695
        %v643 = vpow.pop %v642
        %v644 = vmul.f32 %v588, 1.442695
        %v645 = vpow.pop %v644
        %v646 = vmul.f32 %v589, 1.442695
        %v647 = vpow.pop %v646
        %v648 = vmul.f32 %v590, 1.442695
        %v649 = vpow.pop %v648
        %v650 = vmul.f32 %v591, 1.442695
        %v651 = vpow.pop %v650
        %v652 = vmul.f32 %v592, 1.442695
        %v653 = vpow.pop %v652
        %v654 = vmul.f32 %v593, 1.442695
        %v655 = vpow.pop %v654
        %v656 = vmul.f32 %v594, 1.442695
        %v657 = vpow.pop %v656
        %v658 = vmul.f32 %v595, 1.442695
        %v659 = vpow.pop %v658
        %v660 = vadd.f32 %v597, 1.0
        %v661 = vadd.f32 %v599, 1.0
        %v662 = vadd.f32 %v601, 1.0
        %v663 = vadd.f32 %v603, 1.0
        %v664 = vadd.f32 %v605, 1.0
        %v665 = vadd.f32 %v607, 1.0
        %v666 = vadd.f32 %v609, 1.0
        %v667 = vadd.f32 %v611, 1.0
        %v668 = vadd.f32 %v613, 1.0
        %v669 = vadd.f32 %v615, 1.0
        %v670 = vadd.f32 %v617, 1.0
        %v671 = vadd.f32 %v619, 1.0
        %v672 = vadd.f32 %v621, 1.0
        %v673 = vadd.f32 %v623, 1.0
        %v674 = vadd.f32 %v625, 1.0
        %v675 = vadd.f32 %v627, 1.0
        %v676 = vadd.f32 %v629, 1.0
        %v677 = vadd.f32 %v631, 1.0
        %v678 = vadd.f32 %v633, 1.0
        %v679 = vadd.f32 %v635, 1.0
        %v680 = vadd.f32 %v637, 1.0
        %v681 = vadd.f32 %v639, 1.0
        %v682 = vadd.f32 %v641, 1.0
        %v683 = vadd.f32 %v643, 1.0
        %v684 = vadd.f32 %v645, 1.0
        %v685 = vadd.f32 %v647, 1.0
        %v686 = vadd.f32 %v649, 1.0
        %v687 = vadd.f32 %v651, 1.0
        %v688 = vadd.f32 %v653, 1.0
        %v689 = vadd.f32 %v655, 1.0
        %v690 = vadd.f32 %v657, 1.0
        %v691 = vadd.f32 %v659, 1.0
        %v692 = vrcp.pop %v660
        %v693 = vmul.f32 1.0, %v692
        %v694 = vrcp.pop %v661
        %v695 = vmul.f32 1.0, %v694
        %v696 = vrcp.pop %v662
        %v697 = vmul.f32 1.0, %v696
        %v698 = vrcp.pop %v663
        %v699 = vmul.f32 1.0, %v698
        %v700 = vrcp.pop %v664
        %v701 = vmul.f32 1.0, %v700
        %v702 = vrcp.pop %v665
        %v703 = vmul.f32 1.0, %v702
        %v704 = vrcp.pop %v666
        %v705 = vmul.f32 1.0, %v704
        %v706 = vrcp.pop %v667
        %v707 = vmul.f32 1.0, %v706
        %v708 = vrcp.pop %v668
        %v709 = vmul.f32 1.0, %v708
        %v710 = vrcp.pop %v669
        %v711 = vmul.f32 1.0, %v710
        %v712 = vrcp.pop %v670
        %v713 = vmul.f32 1.0, %v712
        %v714 = vrcp.pop %v671
        %v715 = vmul.f32 1.0, %v714
        %v716 = vrcp.pop %v672
        %v717 = vmul.f32 1.0, %v716
        %v718 = vrcp.pop %v673
        %v719 = vmul.f32 1.0, %v718
        %v720 = vrcp.pop %v674
        %v721 = vmul.f32 1.0, %v720
        %v722 = vrcp.pop %v675
        %v723 = vmul.f32 1.0, %v722
        %v724 = vrcp.pop %v676
        %v725 = vmul.f32 1.0, %v724
        %v726 = vrcp.pop %v677
        %v727 = vmul.f32 1.0, %v726
        %v728 = vrcp.pop %v678
        %v729 = vmul.f32 1.0, %v728
        %v730 = vrcp.pop %v679
        %v731 = vmul.f32 1.0, %v730
        %v732 = vrcp.pop %v680
        %v733 = vmul.f32 1.0, %v732
        %v734 = vrcp.pop %v681
        %v735 = vmul.f32 1.0, %v734
        %v736 = vrcp.pop %v682
        %v737 = vmul.f32 1.0, %v736
        %v738 = vrcp.pop %v683
        %v739 = vmul.f32 1.0, %v738
        %v740 = vrcp.pop %v684
        %v741 = vmul.f32 1.0, %v740
        %v742 = vrcp.pop %v685
        %v743 = vmul.f32 1.0, %v742
        %v744 = vrcp.pop %v686
        %v745 = vmul.f32 1.0, %v744
        %v746 = vrcp.pop %v687
        %v747 = vmul.f32 1.0, %v746
        %v748 = vrcp.pop %v688
        %v749 = vmul.f32 1.0, %v748
        %v750 = vrcp.pop %v689
        %v751 = vmul.f32 1.0, %v750
        %v752 = vrcp.pop %v690
        %v753 = vmul.f32 1.0, %v752
        %v754 = vrcp.pop %v691
        %v755 = vmul.f32 1.0, %v754
        %v756 = vld [vmem:[%s3] sm:$0xff]
        %v757 = vld [vmem:[%s3 + $0x8] sm:$0xff]
        %v758 = vld [vmem:[%s3 + $0x10] sm:$0xff]
        %v759 = vld [vmem:[%s3 + $0x18] sm:$0xff]
        %v760 = vld [vmem:[%s3 + $0x20] sm:$0xff]
        %v761 = vld [vmem:[%s3 + $0x28] sm:$0xff]
        %v762 = vld [vmem:[%s3 + $0x30] sm:$0xff]
        %v763 = vld [vmem:[%s3 + $0x38] sm:$0xff]
        %vm764 = vcmask 523264
        %v766 = vsel %vm764, %v693, 0
        %v769 = vsel %vm764, %v695, 0
        %v772 = vsel %vm764, %v697, 0
        %v775 = vsel %vm764, %v699, 0
        %v778 = vsel %vm764, %v701, 0
        %v781 = vsel %vm764, %v703, 0
        %v784 = vsel %vm764, %v705, 0
        %v787 = vsel %vm764, %v707, 0
        %v790 = vsel %vm764, %v709, 0
        %v793 = vsel %vm764, %v711, 0
        %v796 = vsel %vm764, %v713, 0
        %v799 = vsel %vm764, %v715, 0
        %v802 = vsel %vm764, %v717, 0
        %v805 = vsel %vm764, %v719, 0
        %v808 = vsel %vm764, %v721, 0
        %v811 = vsel %vm764, %v723, 0
        %v814 = vsel %vm764, %v725, 0
        %v817 = vsel %vm764, %v727, 0
        %v820 = vsel %vm764, %v729, 0
        %v823 = vsel %vm764, %v731, 0
        %v826 = vsel %vm764, %v733, 0
        %v829 = vsel %vm764, %v735, 0
        %v832 = vsel %vm764, %v737, 0
        %v835 = vsel %vm764, %v739, 0
        %v838 = vsel %vm764, %v741, 0
        %v841 = vsel %vm764, %v743, 0
        %v844 = vsel %vm764, %v745, 0
        %v847 = vsel %vm764, %v747, 0
        %v850 = vsel %vm764, %v749, 0
        %v853 = vsel %vm764, %v751, 0
        %v856 = vsel %vm764, %v753, 0
        %v859 = vsel %vm764, %v755, 0
        %861 = vmatprep.subr.mxu0 0.0
        %862 = vmatpush1.msra.mxu0 %v756
        %863 = vmatprep.subr.mxu0 0.0
        %864 = vmatpush1.msra.mxu0 %v757
        %865 = vmatprep.subr.mxu0 0.0
        %866 = vmatpush1.msra.mxu0 %v758
        %867 = vmatprep.subr.mxu0 0.0
        %868 = vmatpush1.msra.mxu0 %v759
        %869 = vmatprep.subr.mxu0 0.0
        %870 = vmatpush1.msra.mxu0 %v760
        %871 = vmatprep.subr.mxu0 0.0
        %872 = vmatpush1.msra.mxu0 %v761
        %873 = vmatprep.subr.mxu0 0.0
        %874 = vmatpush1.msra.mxu0 %v762
        %875 = vmatprep.subr.mxu0 0.0
        %876 = vmatpush1.msra.mxu0 %v763
        %877 = vmatprep.subr.mxu0 0.0
        %878 = vmatpush1.msra.mxu0 0.0
        %879 = vmatprep.subr.mxu0 0.0
        %880 = vmatpush1.msra.mxu0 0.0
        %881 = vmatprep.subr.mxu0 0.0
        %882 = vmatpush1.msra.mxu0 0.0
        %883 = vmatprep.subr.mxu0 0.0
        %884 = vmatpush1.msra.mxu0 0.0
        %885 = vmatprep.subr.mxu0 0.0
        %886 = vmatpush1.msra.mxu0 0.0
        %887 = vmatprep.subr.mxu0 0.0
        %888 = vmatpush1.msra.mxu0 0.0
        %889 = vmatprep.subr.mxu0 0.0
        %890 = vmatpush1.msra.mxu0 0.0
        %891 = vmatprep.subr.mxu0 0.0
        %892 = vmatpush1.msra.mxu0 0.0
        %893 = vmatprep.subr.mxu0 0.0
        %894 = vmatpush1.msra.mxu0 0.0
        %895 = vmatprep.subr.mxu0 0.0
        %896 = vmatpush1.msra.mxu0 0.0
        %897 = vmatprep.subr.mxu0 0.0
        %898 = vmatpush1.msra.mxu0 0.0
        %899 = vmatprep.subr.mxu0 0.0
        %900 = vmatpush1.msra.mxu0 0.0
        %901 = vmatprep.subr.mxu0 0.0
        %902 = vmatpush1.msra.mxu0 0.0
        %903 = vmatprep.subr.mxu0 0.0
        %904 = vmatpush1.msra.mxu0 0.0
        %905 = vmatprep.subr.mxu0 0.0
        %906 = vmatpush1.msra.mxu0 0.0
        %907 = vmatprep.subr.mxu0 0.0
        %908 = vmatpush1.msra.mxu0 0.0
        %909 = vmatprep.subr.mxu0 0.0
        %910 = vmatpush1.msra.mxu0 0.0
        %911 = vmatprep.subr.mxu0 0.0
        %912 = vmatpush1.msra.mxu0 0.0
        %913 = vmatprep.subr.mxu0 0.0
        %914 = vmatpush1.msra.mxu0 0.0
        %915 = vmatprep.subr.mxu0 0.0
        %916 = vmatpush1.msra.mxu0 0.0
        %917 = vmatprep.subr.mxu0 0.0
        %918 = vmatpush1.msra.mxu0 0.0
        %919 = vmatprep.subr.mxu0 0.0
        %920 = vmatpush1.msra.mxu0 0.0
        %921 = vmatprep.subr.mxu0 0.0
        %922 = vmatpush1.msra.mxu0 0.0
        %923 = vmatprep.subr.mxu0 0.0
        %924 = vmatpush1.msra.mxu0 0.0
        %925 = vmatprep.mubr.f32.mxu0 0.0
        %926 = vmatmul.mubr.f32.gmra.mrb[0].mxu0 %v766
        %v927 = vpop.f32.mrb[0].mxu0
        %v928 = vadd.f32 0.0, %v927
        %v929 = vpop.f32.mrb[0].mxu0
        %930 = vmatprep.mubr.f32.mxu0 0.0
        %931 = vmatmul.mubr.f32.gmra.mrb[0].mxu0 %v769
        %v932 = vpop.f32.mrb[0].mxu0
        %v933 = vadd.f32 0.0, %v932
        %v934 = vpop.f32.mrb[0].mxu0
        %935 = vmatprep.mubr.f32.mxu0 0.0
        %936 = vmatmul.mubr.f32.gmra.mrb[0].mxu0 %v772
        %v937 = vpop.f32.mrb[0].mxu0
        %v938 = vadd.f32 0.0, %v937
        %v939 = vpop.f32.mrb[0].mxu0
        %940 = vmatprep.mubr.f32.mxu0 0.0
        %941 = vmatmul.mubr.f32.gmra.mrb[0].mxu0 %v775
        %v942 = vpop.f32.mrb[0].mxu0
        %v943 = vadd.f32 0.0, %v942
        %v944 = vpop.f32.mrb[0].mxu0
        %945 = vmatprep.mubr.f32.mxu0 0.0
        %946 = vmatmul.mubr.f32.gmra.mrb[0].mxu0 %v778
        %v947 = vpop.f32.mrb[0].mxu0
        %v948 = vadd.f32 0.0, %v947
        %v949 = vpop.f32.mrb[0].mxu0
        %950 = vmatprep.mubr.f32.mxu0 0.0
        %951 = vmatmul.mubr.f32.gmra.mrb[0].mxu0 %v781
        %v952 = vpop.f32.mrb[0].mxu0
        %v953 = vadd.f32 0.0, %v952
        %v954 = vpop.f32.mrb[0].mxu0
        %955 = vmatprep.mubr.f32.mxu0 0.0
        %956 = vmatmul.mubr.f32.gmra.mrb[0].mxu0 %v784
        %v957 = vpop.f32.mrb[0].mxu0
        %v958 = vadd.f32 0.0, %v957
        %v959 = vpop.f32.mrb[0].mxu0
        %960 = vmatprep.mubr.f32.mxu0 0.0
        %961 = vmatmul.mubr.f32.gmra.mrb[0].mxu0 %v787
        %v962 = vpop.f32.mrb[0].mxu0
        %v963 = vadd.f32 0.0, %v962
        %v964 = vpop.f32.mrb[0].mxu0
        %965 = vmatprep.mubr.f32.mxu0 0.0
        %966 = vmatmul.mubr.f32.gmra.mrb[0].mxu0 %v790
        %v967 = vpop.f32.mrb[0].mxu0
        %v968 = vadd.f32 0.0, %v967
        %v969 = vpop.f32.mrb[0].mxu0
        %970 = vmatprep.mubr.f32.mxu0 0.0
        %971 = vmatmul.mubr.f32.gmra.mrb[0].mxu0 %v793
        %v972 = vpop.f32.mrb[0].mxu0
        %v973 = vadd.f32 0.0, %v972
        %v974 = vpop.f32.mrb[0].mxu0
        %975 = vmatprep.mubr.f32.mxu0 0.0
        %976 = vmatmul.mubr.f32.gmra.mrb[0].mxu0 %v796
        %v977 = vpop.f32.mrb[0].mxu0
        %v978 = vadd.f32 0.0, %v977
        %v979 = vpop.f32.mrb[0].mxu0
        %980 = vmatprep.mubr.f32.mxu0 0.0
        %981 = vmatmul.mubr.f32.gmra.mrb[0].mxu0 %v799
        %v982 = vpop.f32.mrb[0].mxu0
        %v983 = vadd.f32 0.0, %v982
        %v984 = vpop.f32.mrb[0].mxu0
        %985 = vmatprep.mubr.f32.mxu0 0.0
        %986 = vmatmul.mubr.f32.gmra.mrb[0].mxu0 %v802
        %v987 = vpop.f32.mrb[0].mxu0
        %v988 = vadd.f32 0.0, %v987
        %v989 = vpop.f32.mrb[0].mxu0
        %990 = vmatprep.mubr.f32.mxu0 0.0
        %991 = vmatmul.mubr.f32.gmra.mrb[0].mxu0 %v805
        %v992 = vpop.f32.mrb[0].mxu0
        %v993 = vadd.f32 0.0, %v992
        %v994 = vpop.f32.mrb[0].mxu0
        %995 = vmatprep.mubr.f32.mxu0 0.0
        %996 = vmatmul.mubr.f32.gmra.mrb[0].mxu0 %v808
        %v997 = vpop.f32.mrb[0].mxu0
        %v998 = vadd.f32 0.0, %v997
        %v999 = vpop.f32.mrb[0].mxu0
        %1000 = vmatprep.mubr.f32.mxu0 0.0
        %1001 = vmatmul.mubr.f32.gmra.mrb[0].mxu0 %v811
        %v1002 = vpop.f32.mrb[0].mxu0
        %v1003 = vadd.f32 0.0, %v1002
        %v1004 = vpop.f32.mrb[0].mxu0
        %1005 = vmatprep.mubr.f32.mxu0 0.0
        %1006 = vmatmul.mubr.f32.gmra.mrb[0].mxu0 %v814
        %v1007 = vpop.f32.mrb[0].mxu0
        %v1008 = vadd.f32 0.0, %v1007
        %v1009 = vpop.f32.mrb[0].mxu0
        %1010 = vmatprep.mubr.f32.mxu0 0.0
        %1011 = vmatmul.mubr.f32.gmra.mrb[0].mxu0 %v817
        %v1012 = vpop.f32.mrb[0].mxu0
        %v1013 = vadd.f32 0.0, %v1012
        %v1014 = vpop.f32.mrb[0].mxu0
        %1015 = vmatprep.mubr.f32.mxu0 0.0
        %1016 = vmatmul.mubr.f32.gmra.mrb[0].mxu0 %v820
        %v1017 = vpop.f32.mrb[0].mxu0
        %v1018 = vadd.f32 0.0, %v1017
        %v1019 = vpop.f32.mrb[0].mxu0
        %1020 = vmatprep.mubr.f32.mxu0 0.0
        %1021 = vmatmul.mubr.f32.gmra.mrb[0].mxu0 %v823
        %v1022 = vpop.f32.mrb[0].mxu0
        %v1023 = vadd.f32 0.0, %v1022
        %v1024 = vpop.f32.mrb[0].mxu0
        %1025 = vmatprep.mubr.f32.mxu0 0.0
        %1026 = vmatmul.mubr.f32.gmra.mrb[0].mxu0 %v826
        %v1027 = vpop.f32.mrb[0].mxu0
        %v1028 = vadd.f32 0.0, %v1027
        %v1029 = vpop.f32.mrb[0].mxu0
        %1030 = vmatprep.mubr.f32.mxu0 0.0
        %1031 = vmatmul.mubr.f32.gmra.mrb[0].mxu0 %v829
        %v1032 = vpop.f32.mrb[0].mxu0
        %v1033 = vadd.f32 0.0, %v1032
        %v1034 = vpop.f32.mrb[0].mxu0
        %1035 = vmatprep.mubr.f32.mxu0 0.0
        %1036 = vmatmul.mubr.f32.gmra.mrb[0].mxu0 %v832
        %v1037 = vpop.f32.mrb[0].mxu0
        %v1038 = vadd.f32 0.0, %v1037
        %v1039 = vpop.f32.mrb[0].mxu0
        %1040 = vmatprep.mubr.f32.mxu0 0.0
        %1041 = vmatmul.mubr.f32.gmra.mrb[0].mxu0 %v835
        %v1042 = vpop.f32.mrb[0].mxu0
        %v1043 = vadd.f32 0.0, %v1042
        %v1044 = vpop.f32.mrb[0].mxu0
        %1045 = vmatprep.mubr.f32.mxu0 0.0
        %1046 = vmatmul.mubr.f32.gmra.mrb[0].mxu0 %v838
        %v1047 = vpop.f32.mrb[0].mxu0
        %v1048 = vadd.f32 0.0, %v1047
        %v1049 = vpop.f32.mrb[0].mxu0
        %1050 = vmatprep.mubr.f32.mxu0 0.0
        %1051 = vmatmul.mubr.f32.gmra.mrb[0].mxu0 %v841
        %v1052 = vpop.f32.mrb[0].mxu0
        %v1053 = vadd.f32 0.0, %v1052
        %v1054 = vpop.f32.mrb[0].mxu0
        %1055 = vmatprep.mubr.f32.mxu0 0.0
        %1056 = vmatmul.mubr.f32.gmra.mrb[0].mxu0 %v844
        %v1057 = vpop.f32.mrb[0].mxu0
        %v1058 = vadd.f32 0.0, %v1057
        %v1059 = vpop.f32.mrb[0].mxu0
        %1060 = vmatprep.mubr.f32.mxu0 0.0
        %1061 = vmatmul.mubr.f32.gmra.mrb[0].mxu0 %v847
        %v1062 = vpop.f32.mrb[0].mxu0
        %v1063 = vadd.f32 0.0, %v1062
        %v1064 = vpop.f32.mrb[0].mxu0
        %1065 = vmatprep.mubr.f32.mxu0 0.0
        %1066 = vmatmul.mubr.f32.gmra.mrb[0].mxu0 %v850
        %v1067 = vpop.f32.mrb[0].mxu0
        %v1068 = vadd.f32 0.0, %v1067
        %v1069 = vpop.f32.mrb[0].mxu0
        %1070 = vmatprep.mubr.f32.mxu0 0.0
        %1071 = vmatmul.mubr.f32.gmra.mrb[0].mxu0 %v853
        %v1072 = vpop.f32.mrb[0].mxu0
        %v1073 = vadd.f32 0.0, %v1072
        %v1074 = vpop.f32.mrb[0].mxu0
        %1075 = vmatprep.mubr.f32.mxu0 0.0
        %1076 = vmatmul.mubr.f32.gmra.mrb[0].mxu0 %v856
        %v1077 = vpop.f32.mrb[0].mxu0
        %v1078 = vadd.f32 0.0, %v1077
        %v1079 = vpop.f32.mrb[0].mxu0
        %1080 = vmatprep.mubr.f32.mxu0 0.0
        %1081 = vmatmul.mubr.f32.gmra.mrb[0].mxu0 %v859
        %v1082 = vpop.f32.mrb[0].mxu0
        %v1083 = vadd.f32 0.0, %v1082
        %v1084 = vpop.f32.mrb[0].mxu0
        %1085 = vdwg.mxu0
        %1086 = vst [vmem:[%s191] sm:$0xff] %v928
        %1087 = vst [vmem:[%s191 + $0x8] sm:$0xff] %v933
        %1088 = vst [vmem:[%s191 + $0x10] sm:$0xff] %v938
        %1089 = vst [vmem:[%s191 + $0x18] sm:$0xff] %v943
        %1090 = vst [vmem:[%s191 + $0x20] sm:$0xff] %v948
        %1091 = vst [vmem:[%s191 + $0x28] sm:$0xff] %v953
        %1092 = vst [vmem:[%s191 + $0x30] sm:$0xff] %v958
        %1093 = vst [vmem:[%s191 + $0x38] sm:$0xff] %v963
        %1094 = vst [vmem:[%s191 + $0x40] sm:$0xff] %v968
        %1095 = vst [vmem:[%s191 + $0x48] sm:$0xff] %v973
        %1096 = vst [vmem:[%s191 + $0x50] sm:$0xff] %v978
        %1097 = vst [vmem:[%s191 + $0x58] sm:$0xff] %v983
        %1098 = vst [vmem:[%s191 + $0x60] sm:$0xff] %v988
        %1099 = vst [vmem:[%s191 + $0x68] sm:$0xff] %v993
        %1100 = vst [vmem:[%s191 + $0x70] sm:$0xff] %v998
        %1101 = vst [vmem:[%s191 + $0x78] sm:$0xff] %v1003
        %1102 = vst [vmem:[%s191 + $0x80] sm:$0xff] %v1008
        %1103 = vst [vmem:[%s191 + $0x88] sm:$0xff] %v1013
        %1104 = vst [vmem:[%s191 + $0x90] sm:$0xff] %v1018
        %1105 = vst [vmem:[%s191 + $0x98] sm:$0xff] %v1023
        %1106 = vst [vmem:[%s191 + $0xa0] sm:$0xff] %v1028
        %1107 = vst [vmem:[%s191 + $0xa8] sm:$0xff] %v1033
        %1108 = vst [vmem:[%s191 + $0xb0] sm:$0xff] %v1038
        %1109 = vst [vmem:[%s191 + $0xb8] sm:$0xff] %v1043
        %1110 = vst [vmem:[%s191 + $0xc0] sm:$0xff] %v1048
        %1111 = vst [vmem:[%s191 + $0xc8] sm:$0xff] %v1053
        %1112 = vst [vmem:[%s191 + $0xd0] sm:$0xff] %v1058
        %1113 = vst [vmem:[%s191 + $0xd8] sm:$0xff] %v1063
        %1114 = vst [vmem:[%s191 + $0xe0] sm:$0xff] %v1068
        %1115 = vst [vmem:[%s191 + $0xe8] sm:$0xff] %v1073
        %1116 = vst [vmem:[%s191 + $0xf0] sm:$0xff] %v1078
        %1117 = vst [vmem:[%s191 + $0xf8] sm:$0xff] %v1083
        %s1118 = sand.u32 %s115, 1
        %s1119 = scalar_lea.sflag [#allocation3], %s1118
        %s1120 = sand.u32 %s115, 1
        %s1121 = smul.addr %s1120, 256
        %s1122 = scalar_lea.vmem [#allocation2], %s1121
        // Predicated region
        $region37: #{tpu_custom_call.1} parent=35 // pred_check
          %p1123 = pneg %p125
        $region38: #{tpu_custom_call.1} parent=35 // pred_check_branch
          %1125 = sbr.rel (%p1123) target = $region40
        $region39: #{tpu_custom_call.1} parent=35 // pred_region
          %s1126 = smul.u32 32, %s18
          %s1128 = ssub.s32 4096, 4096
          %1129 = vsyncadd %s1119, %s1128
          %s1130 = smul.addr %s1126, 128
          %s1131 = scalar_lea.hbm %s4, %s1130
          %s1132 = sshll.u32 %s1122, 4
          %s1133 = int_to_ptr.vmem [resolvable:$true] %s1132
          %1138 = dma.vmem_to_hbm [thread:$0]  %s1133, 4096, %s1131, %s1119, 128, 128, 8
        $region40: #{tpu_custom_call.1} parent=35 // pred_fallthru
          _
      $region36: #{tpu_custom_call.1} parent=5 // pred_fallthru
        _
      %p1139 = scmp.le.s32.totalorder 2, %s13
      // Predicated region
      $region41: #{tpu_custom_call.1} parent=5 // pred_check
        %p1140 = pneg %p1139
      $region42: #{tpu_custom_call.1} parent=5 // pred_check_branch
        %1142 = sbr.rel (%p1140) target = $region44
      $region43: #{tpu_custom_call.1} parent=5 // pred_region
        %s1143 = ssub.s32 %s13, 2
        // Predicated region
        $region45: #{tpu_custom_call.1} parent=43 // pred_check
          %p1144 = pneg %p131
        $region46: #{tpu_custom_call.1} parent=43 // pred_check_branch
          %1146 = sbr.rel (%p1144) target = $region48
        $region47: #{tpu_custom_call.1} parent=43 // pred_region
          %s1147 = sand.u32 %s116, 1
          %s1148 = scalar_lea.sflag [#allocation3], %s1147
          %s1149 = sand.u32 %s116, 1
          %s1150 = smul.addr %s1149, 256
          %s1151 = scalar_lea.vmem [#allocation2], %s1150
          %1152 = dma.done %s1148, 4096
        $region48: #{tpu_custom_call.1} parent=43 // pred_fallthru
          _
      $region44: #{tpu_custom_call.1} parent=5 // pred_fallthru
        _
    $region6: #{tpu_custom_call.1} parent=1 // loop_footer
      %s17 = sadd.s32 1, %s13
    $region7: #{tpu_custom_call.1} parent=1 // loop_footer_branch
      %12 = sbr.rel target = $region3
    $region8: #{tpu_custom_call.1} parent=1 // loop_exit
      _
    %1153 = vsyncpa [#allocation3], 1
    %s1154 = scalar_lea.sflag [#allocation3], 1
    %1155 = vsyncpa %s1154, 1

</llo_original>
